<compile_context>
chip_gen: v6e
topology: v6e:2x2x1
jax: 0.10.0
libtpu: 0.0.40
codegen_flags: <defaults>
</compile_context>

<pallas_src>
import functools
import math

import jax
import jax.numpy as jnp
from jax import lax
from jax.experimental import pallas as pl
from jax.experimental.pallas import tpu as pltpu


def _city_encoder_kernel(city_ref, depot_xy_ref, wd_ref, bd_ref, wc_ref, bc_ref,
                         pos0_ref, pos_tail_ref, graph_ref, mean_ref, *,
                         batch, n_agents):
    BN = city_ref.shape[0]
    B = batch
    N = BN // B
    E = pos0_ref.shape[-1]
    T = pos_tail_ref.shape[0]          # zero-padded tail rows (>= n_agents)
    S = N + n_agents                   # real graph sequence length

    # City projection for every row.  K == 2 -> two rank-1 VPU updates, lane width E.
    x = city_ref[...]                                                      # [B*N, 2]
    wc = wc_ref[...]                                                       # [2, E]
    proj_c = x[:, 0:1] * wc[0:1, :] + x[:, 1:2] * wc[1:2, :] + bc_ref[...]  # [B*N, E]
    proj_c3 = proj_c.reshape(B, N, E)

    # Depot projection recomputed from the B depot coordinates (avoids a stride-N sublane
    # gather out of proj_c; B rows of VPU work is negligible).
    dxy = depot_xy_ref[...]                                                # [B, 2]
    wd = wd_ref[...]                                                       # [2, E]
    depot_e = dxy[:, 0:1] * wd[0:1, :] + dxy[:, 1:2] * wd[1:2, :] + bd_ref[...]  # [B, E]

    # Head rows 0..N-1: row 0 of each batch is depot_embed + pos[0], the rest is city_embed.
    row0 = depot_e + pos0_ref[...]                                         # [B, E]
    is_depot = lax.broadcasted_iota(jnp.int32, (B, N, E), 1) == 0
    head = jnp.where(is_depot, row0[:, None, :], proj_c3)                  # [B, N, E]
    graph_ref[:, 0:N, :] = head                                            # offset-0 store

    # Tail rows N..S-1: depot_embed + pos[1:].  pos_tail is zero-padded to T rows so this is a
    # full-tile aligned store when N % 8 == 0; padded rows are sliced off in the wrapper.
    pos_tail = pos_tail_ref[...]                                           # [T, E]
    tail = depot_e[:, None, :] + pos_tail[None, :, :]                      # [B, T, E]
    graph_ref[:, N:N + T, :] = tail

    # graph.mean(dim=1) over the S real rows, computed from the parts (no output re-read).
    head_sum = jnp.sum(head, axis=1)                                       # [B, E] (XLU)
    tail_sum = n_agents * depot_e + jnp.sum(pos_tail, axis=0)[None, :]     # [B, E]
    mean_ref[...] = (head_sum + tail_sum) * (1.0 / S)                      # dense 2D store


def _round_up(x, m):
    return ((x + m - 1) // m) * m


def positional_encoding(seq_len, d_model):
    """Matches PositionalEncoder (sin on even columns, cos on odd columns)."""
    position = jnp.arange(seq_len, dtype=jnp.float32)[:, None]
    div_term = jnp.exp(jnp.arange(0, d_model, 2, dtype=jnp.float32)
                       * (-math.log(10000.0) / d_model))
    pe = jnp.zeros((seq_len, d_model), jnp.float32)
    pe = pe.at[:, 0::2].set(jnp.sin(position * div_term))
    pe = pe.at[:, 1::2].set(jnp.cos(position * div_term))
    return pe


@functools.partial(jax.jit, static_argnames=("n_agents",))
def city_encoder(city, params, *, n_agents, city_mask=None):
    """Pallas implementation of CityEncoder.forward (attention stack = identity, see TODO)."""
    B, N, in_dim = city.shape
    assert in_dim == 2, "CityEmbedding kernel is specialized to 2-D city coordinates"
    assert N >= 2 and n_agents >= 1
    E = params["depot_w"].shape[0]
    A = n_agents + 1
    S = N + n_agents
    S_pad = _round_up(S, 8)
    T = S_pad - N

    if city_mask is not None:
        city_mask = city_mask.at[:, 0].set(False)
        # TODO(synk): city_mask only feeds the (unimplemented) MultiHeadAttentionLayer stack.

    # Input-independent positional projection hoisted out of the kernel (fuses under jit):
    # pos = alpha * (PE[:A] @ pos_w^T + pos_b)  -> [A, E]  (~3 KB instead of an E*E weight DMA
    # plus a ~2-5% utilization MXU pass inside the kernel).
    pe = positional_encoding(A, E)
    pos = params["alpha"] * (pe @ params["pos_w"].T + params["pos_b"])     # [A, E]
    pos0 = pos[0:1, :]                                                     # [1, E]
    pos_tail = jnp.zeros((T, E), jnp.float32).at[:n_agents, :].set(pos[1:, :])

    wd = params["depot_w"].T                  # [2, E]
    bd = params["depot_b"][None, :]           # [1, E]
    wc = params["city_w"].T                   # [2, E]
    bc = params["city_b"][None, :]            # [1, E]

    city_flat = city.reshape(B * N, in_dim)   # [B*N, 2]
    depot_xy = city[:, 0, :]                  # [B, 2]

    vmem = lambda: pl.BlockSpec(memory_space=pltpu.MemorySpace.VMEM)
    graph_pad, mean2d = pl.pallas_call(
        functools.partial(_city_encoder_kernel, batch=B, n_agents=n_agents),
        out_shape=(jax.ShapeDtypeStruct((B, S_pad, E), jnp.float32),
                   jax.ShapeDtypeStruct((B, E), jnp.float32)),
        in_specs=[vmem() for _ in range(8)],
        out_specs=(vmem(), vmem()),
    )(city_flat, depot_xy, wd, bd, wc, bc, pos0, pos_tail)

    # TODO(synk): for large B*N add a batch grid (dimension_semantics=("parallel",)) so v7x's
    #             two TensorCores split the work and per-step VMEM stays bounded.
    return graph_pad[:, :S, :], mean2d[:, None, :]


def _init_linear(key, out_dim, in_dim):
    # deterministic init mimicking nn.Linear default (uniform +-1/sqrt(fan_in))
    kw, kb = jax.random.split(key)
    bound = 1.0 / math.sqrt(in_dim)
    w = jax.random.uniform(kw, (out_dim, in_dim), jnp.float32, -bound, bound)
    b = jax.random.uniform(kb, (out_dim,), jnp.float32, -bound, bound)
    return w, b


def _reference(city, n_agents, params):
    """Pure-JAX reference for CityEncoder.forward (attention layers = identity)."""
    B, N, _ = city.shape
    E = params["depot_w"].shape[0]
    A = n_agents + 1
    depot_embed = city[:, 0:1] @ params["depot_w"].T + params["depot_b"]   # [B, 1, E]
    city_embed = city[:, 1:] @ params["city_w"].T + params["city_b"]       # [B, N-1, E]
    pe = positional_encoding(A, E)
    pos = params["alpha"] * (pe @ params["pos_w"].T + params["pos_b"])     # [A, E]
    depot_rep = jnp.broadcast_to(depot_embed, (B, A, E))
    depot_pos = depot_rep + pos[None]
    graph = jnp.concatenate([depot_pos[:, 0:1], city_embed, depot_pos[:, 1:]], axis=1)
    return graph, graph.mean(axis=1, keepdims=True)


if __name__ == "__main__":
    key = jax.random.PRNGKey(0)
    keys = jax.random.split(key, 4)

    B, N, IN_DIM, E = 2, 16, 2, 128   # batch, cities, input_dim, embed_dim
    n_agents = 5

    depot_w, depot_b = _init_linear(keys[0], E, IN_DIM)   # CityEmbedding.depot_embed
    city_w, city_b = _init_linear(keys[1], E, IN_DIM)     # CityEmbedding.city_embed
    pos_w, pos_b = _init_linear(keys[2], E, E)            # pos_embed_proj
    # PyTorch initializes alpha to zeros(1); use a nonzero value so the pos path is exercised.
    alpha = jnp.full((1,), 0.5, jnp.float32)
    params = {"depot_w": depot_w, "depot_b": depot_b,
              "city_w": city_w, "city_b": city_b,
              "pos_w": pos_w, "pos_b": pos_b, "alpha": alpha}

    city = jax.random.normal(keys[3], (B, N, IN_DIM), jnp.float32)

    graph, graph_mean = city_encoder(city, params, n_agents=n_agents)
    graph = jax.block_until_ready(graph)
    graph_mean = jax.block_until_ready(graph_mean)

    ref_graph, ref_mean = _reference(city, n_agents, params)
    assert graph.shape == (B, N + n_agents, E)
    assert graph_mean.shape == (B, 1, E)
    err_g = float(jnp.max(jnp.abs(graph - ref_graph)))
    err_m = float(jnp.max(jnp.abs(graph_mean - ref_mean)))
    assert err_g < 1e-4 and err_m < 1e-4, ("mismatch vs reference", err_g, err_m)

    print("KERNEL_OK")
</pallas_src>

<mosaic_0001>
module attributes {stable_mosaic.version = 11 : i64} {
  func.func @_city_encoder_kernel(%arg0: memref<32x2xf32, #tpu.memory_space<vmem>>, %arg1: memref<2x2xf32, #tpu.memory_space<vmem>>, %arg2: memref<2x128xf32, #tpu.memory_space<vmem>>, %arg3: memref<1x128xf32, #tpu.memory_space<vmem>>, %arg4: memref<2x128xf32, #tpu.memory_space<vmem>>, %arg5: memref<1x128xf32, #tpu.memory_space<vmem>>, %arg6: memref<1x128xf32, #tpu.memory_space<vmem>>, %arg7: memref<8x128xf32, #tpu.memory_space<vmem>>, %arg8: memref<2x24x128xf32, #tpu.memory_space<vmem>>, %arg9: memref<2x128xf32, #tpu.memory_space<vmem>>) attributes {dimension_semantics = [], scalar_prefetch = 0 : i64, scratch_operands = 0 : i64, tpu.core_type = #tpu.core_type<tc>} {
    %c0 = arith.constant 0 : index
    %c0_0 = arith.constant 0 : index
    %0 = vector.load %arg0[%c0, %c0_0] : memref<32x2xf32, #tpu.memory_space<vmem>>, vector<32x2xf32>
    %c0_1 = arith.constant 0 : index
    %c0_2 = arith.constant 0 : index
    %1 = vector.load %arg4[%c0_1, %c0_2] : memref<2x128xf32, #tpu.memory_space<vmem>>, vector<2x128xf32>
    %2 = vector.extract_strided_slice %0 {offsets = [0, 0], sizes = [32, 1], strides = [1, 1]} : vector<32x2xf32> to vector<32x1xf32>
    %3 = vector.extract_strided_slice %1 {offsets = [0, 0], sizes = [1, 128], strides = [1, 1]} : vector<2x128xf32> to vector<1x128xf32>
    %4 = vector.broadcast %2 : vector<32x1xf32> to vector<32x128xf32>
    %5 = vector.broadcast %3 : vector<1x128xf32> to vector<32x128xf32>
    %6 = arith.mulf %4, %5 : vector<32x128xf32>
    %7 = vector.extract_strided_slice %0 {offsets = [0, 1], sizes = [32, 1], strides = [1, 1]} : vector<32x2xf32> to vector<32x1xf32>
    %8 = vector.extract_strided_slice %1 {offsets = [1, 0], sizes = [1, 128], strides = [1, 1]} : vector<2x128xf32> to vector<1x128xf32>
    %9 = vector.broadcast %7 : vector<32x1xf32> to vector<32x128xf32>
    %10 = vector.broadcast %8 : vector<1x128xf32> to vector<32x128xf32>
    %11 = arith.mulf %9, %10 : vector<32x128xf32>
    %12 = arith.addf %6, %11 : vector<32x128xf32>
    %c0_3 = arith.constant 0 : index
    %c0_4 = arith.constant 0 : index
    %13 = vector.load %arg5[%c0_3, %c0_4] : memref<1x128xf32, #tpu.memory_space<vmem>>, vector<1x128xf32>
    %14 = vector.broadcast %13 : vector<1x128xf32> to vector<32x128xf32>
    %15 = arith.addf %12, %14 : vector<32x128xf32>
    %16 = vector.shape_cast %15 : vector<32x128xf32> to vector<2x16x128xf32>
    %c0_5 = arith.constant 0 : index
    %c0_6 = arith.constant 0 : index
    %17 = vector.load %arg1[%c0_5, %c0_6] : memref<2x2xf32, #tpu.memory_space<vmem>>, vector<2x2xf32>
    %c0_7 = arith.constant 0 : index
    %c0_8 = arith.constant 0 : index
    %18 = vector.load %arg2[%c0_7, %c0_8] : memref<2x128xf32, #tpu.memory_space<vmem>>, vector<2x128xf32>
    %19 = vector.extract_strided_slice %17 {offsets = [0, 0], sizes = [2, 1], strides = [1, 1]} : vector<2x2xf32> to vector<2x1xf32>
    %20 = vector.extract_strided_slice %18 {offsets = [0, 0], sizes = [1, 128], strides = [1, 1]} : vector<2x128xf32> to vector<1x128xf32>
    %21 = vector.broadcast %19 : vector<2x1xf32> to vector<2x128xf32>
    %22 = vector.broadcast %20 : vector<1x128xf32> to vector<2x128xf32>
    %23 = arith.mulf %21, %22 : vector<2x128xf32>
    %24 = vector.extract_strided_slice %17 {offsets = [0, 1], sizes = [2, 1], strides = [1, 1]} : vector<2x2xf32> to vector<2x1xf32>
    %25 = vector.extract_strided_slice %18 {offsets = [1, 0], sizes = [1, 128], strides = [1, 1]} : vector<2x128xf32> to vector<1x128xf32>
    %26 = vector.broadcast %24 : vector<2x1xf32> to vector<2x128xf32>
    %27 = vector.broadcast %25 : vector<1x128xf32> to vector<2x128xf32>
    %28 = arith.mulf %26, %27 : vector<2x128xf32>
    %29 = arith.addf %23, %28 : vector<2x128xf32>
    %c0_9 = arith.constant 0 : index
    %c0_10 = arith.constant 0 : index
    %30 = vector.load %arg3[%c0_9, %c0_10] : memref<1x128xf32, #tpu.memory_space<vmem>>, vector<1x128xf32>
    %31 = vector.broadcast %30 : vector<1x128xf32> to vector<2x128xf32>
    %32 = arith.addf %29, %31 : vector<2x128xf32>
    %c0_11 = arith.constant 0 : index
    %c0_12 = arith.constant 0 : index
    %33 = vector.load %arg6[%c0_11, %c0_12] : memref<1x128xf32, #tpu.memory_space<vmem>>, vector<1x128xf32>
    %34 = vector.broadcast %33 : vector<1x128xf32> to vector<2x128xf32>
    %35 = arith.addf %32, %34 : vector<2x128xf32>
    %36 = tpu.iota {dimensions = array<i32: 1>} : vector<2x16x128xi32>
    %c0_i32 = arith.constant 0 : i32
    %37 = vector.broadcast %c0_i32 : i32 to vector<2x16x128xi32>
    %38 = arith.cmpi eq, %36, %37 : vector<2x16x128xi32>
    %39 = vector.shape_cast %35 : vector<2x128xf32> to vector<2x1x128xf32>
    %40 = vector.shape_cast %39 : vector<2x1x128xf32> to vector<2x1x128xf32>
    %41 = vector.broadcast %40 : vector<2x1x128xf32> to vector<2x16x128xf32>
    %42 = arith.select %38, %41, %16 : vector<2x16x128xi1>, vector<2x16x128xf32>
    %c0_13 = arith.constant 0 : index
    %c0_14 = arith.constant 0 : index
    %c0_15 = arith.constant 0 : index
    %43 = vector.load %arg8[%c0_13, %c0_14, %c0_15] : memref<2x24x128xf32, #tpu.memory_space<vmem>>, vector<2x16x128xf32>
    tpu.vector_store %arg8[%c0_13, %c0_14, %c0_15], %42 {strides = array<i32>} : memref<2x24x128xf32, #tpu.memory_space<vmem>>, vector<2x16x128xf32>,
    %c0_16 = arith.constant 0 : index
    %c0_17 = arith.constant 0 : index
    %44 = vector.load %arg7[%c0_16, %c0_17] : memref<8x128xf32, #tpu.memory_space<vmem>>, vector<8x128xf32>
    %45 = vector.shape_cast %32 : vector<2x128xf32> to vector<2x1x128xf32>
    %46 = vector.shape_cast %44 : vector<8x128xf32> to vector<1x8x128xf32>
    %47 = vector.broadcast %45 : vector<2x1x128xf32> to vector<2x8x128xf32>
    %48 = vector.broadcast %46 : vector<1x8x128xf32> to vector<2x8x128xf32>
    %49 = arith.addf %47, %48 : vector<2x8x128xf32>
    %c0_18 = arith.constant 0 : index
    %c16 = arith.constant 16 : index
    %c0_19 = arith.constant 0 : index
    %50 = vector.load %arg8[%c0_18, %c16, %c0_19] : memref<2x24x128xf32, #tpu.memory_space<vmem>>, vector<2x8x128xf32>
    tpu.vector_store %arg8[%c0_18, %c16, %c0_19], %49 {strides = array<i32>} : memref<2x24x128xf32, #tpu.memory_space<vmem>>, vector<2x8x128xf32>,
    %cst = arith.constant dense<0.000000e+00> : vector<2x128xf32>
    %51 = vector.multi_reduction <add>, %42, %cst [1] : vector<2x16x128xf32> to vector<2x128xf32>
    %cst_20 = arith.constant 5.000000e+00 : f32
    %52 = vector.broadcast %cst_20 : f32 to vector<2x128xf32>
    %53 = arith.mulf %52, %32 : vector<2x128xf32>
    %cst_21 = arith.constant dense<0.000000e+00> : vector<128xf32>
    %54 = vector.multi_reduction <add>, %44, %cst_21 [0] : vector<8x128xf32> to vector<128xf32>
    %55 = vector.shape_cast %54 : vector<128xf32> to vector<1x128xf32>
    %56 = vector.broadcast %55 : vector<1x128xf32> to vector<2x128xf32>
    %57 = arith.addf %53, %56 : vector<2x128xf32>
    %58 = arith.addf %51, %57 : vector<2x128xf32>
    %cst_22 = arith.constant 0.0476190485 : f32
    %59 = vector.broadcast %cst_22 : f32 to vector<2x128xf32>
    %60 = arith.mulf %58, %59 : vector<2x128xf32>
    %c0_23 = arith.constant 0 : index
    %c0_24 = arith.constant 0 : index
    %61 = vector.load %arg9[%c0_23, %c0_24] : memref<2x128xf32, #tpu.memory_space<vmem>>, vector<2x128xf32>
    tpu.vector_store %arg9[%c0_23, %c0_24], %60 {strides = array<i32>} : memref<2x128xf32, #tpu.memory_space<vmem>>, vector<2x128xf32>,
    return
  }
}

</mosaic_0001>

<llo_original>
// kernel: city_encoder.1
$region0: #{city_encoder.1}
  #allocation0 [shape = 'u32[]', space=smem, size = 0x4, offset = 0x4, fixed_abs, tag = 'smem constant byte address 0x4 - core index']
  #allocation1 [shape = 'u32[144,128]{1,0:T(1,128)}', space=vmem, size = 0x12000, scoped, tag = 'internal scratch']
  %s0 = inlined_call_operand.vmem [shape: f32[32,2], index: 0, kind: input, shape index: {}]
  %s1 = inlined_call_operand.vmem [shape: f32[2,2], index: 1, kind: input, shape index: {}]
  %s2 = inlined_call_operand.vmem [shape: f32[2,128], index: 2, kind: input, shape index: {}]
  %s3 = inlined_call_operand.vmem [shape: f32[1,128], index: 3, kind: input, shape index: {}]
  %s4 = inlined_call_operand.vmem [shape: f32[2,128], index: 4, kind: input, shape index: {}]
  %s5 = inlined_call_operand.vmem [shape: f32[1,128], index: 5, kind: input, shape index: {}]
  %s6 = inlined_call_operand.vmem [shape: f32[1,128], index: 6, kind: input, shape index: {}]
  %s7 = inlined_call_operand.vmem [shape: f32[8,128], index: 7, kind: input, shape index: {}]
  %s8 = inlined_call_operand.vmem [shape: f32[2,24,128], index: 8, kind: output, shape index: {0}]
  %s9 = inlined_call_operand.hbm [shape: f32[2,128], index: 9, kind: output, shape index: {1}]
  %10 = xla_tuple %s8, %s9
  %s11 = sld [smem:[#allocation0]]
  $region50: #{city_encoder.1} parent=0
    _
  %s13 = ssub.s32 1, %s11
  %s14 = scalar_select 0, %s13, %s11
  $region1: #{city_encoder.1} parent=0
    #allocation2 [shape = 'u8[1024]{0}', space=vmem, size = 0x400, scoped, tag = 'output window, operand 1, single buffered']
    #allocation3 [shape = 's32[1]{0}', space=sflag, size = 0x4, scoped, tag = 'scoped memory for city_encoder.1']
    %15 = vsyncpa [#allocation3], 0
    // Predicated region
    $region2: #{city_encoder.1} parent=1 // pred_check
      _
    $region3: #{city_encoder.1} parent=1 // pred_check_branch
      %17 = sbr.rel (0) target = $region5
    $region4: #{city_encoder.1} parent=1 // pred_region
      _
    $region5: #{city_encoder.1} parent=1 // pred_fallthru
      _
    // Predicated region
    $region6: #{city_encoder.1} parent=1 // pred_check
      _
    $region7: #{city_encoder.1} parent=1 // pred_check_branch
      %19 = sbr.rel (0) target = $region9
    $region8: #{city_encoder.1} parent=1 // pred_region
      _
    $region9: #{city_encoder.1} parent=1 // pred_fallthru
      _
    // Predicated region
    $region10: #{city_encoder.1} parent=1 // pred_check
      _
    $region11: #{city_encoder.1} parent=1 // pred_check_branch
      %21 = sbr.rel (0) target = $region13
    $region12: #{city_encoder.1} parent=1 // pred_region
      _
    $region13: #{city_encoder.1} parent=1 // pred_fallthru
      _
    // Predicated region
    $region14: #{city_encoder.1} parent=1 // pred_check
      _
    $region15: #{city_encoder.1} parent=1 // pred_check_branch
      %23 = sbr.rel (0) target = $region17
    $region16: #{city_encoder.1} parent=1 // pred_region
      _
    $region17: #{city_encoder.1} parent=1 // pred_fallthru
      _
    // Predicated region
    $region18: #{city_encoder.1} parent=1 // pred_check
      _
    $region19: #{city_encoder.1} parent=1 // pred_check_branch
      %25 = sbr.rel (0) target = $region21
    $region20: #{city_encoder.1} parent=1 // pred_region
      _
    $region21: #{city_encoder.1} parent=1 // pred_fallthru
      _
    // Predicated region
    $region22: #{city_encoder.1} parent=1 // pred_check
      _
    $region23: #{city_encoder.1} parent=1 // pred_check_branch
      %27 = sbr.rel (0) target = $region25
    $region24: #{city_encoder.1} parent=1 // pred_region
      _
    $region25: #{city_encoder.1} parent=1 // pred_fallthru
      _
    // Predicated region
    $region26: #{city_encoder.1} parent=1 // pred_check
      _
    $region27: #{city_encoder.1} parent=1 // pred_check_branch
      %29 = sbr.rel (0) target = $region29
    $region28: #{city_encoder.1} parent=1 // pred_region
      _
    $region29: #{city_encoder.1} parent=1 // pred_fallthru
      _
    // Predicated region
    $region30: #{city_encoder.1} parent=1 // pred_check
      _
    $region31: #{city_encoder.1} parent=1 // pred_check_branch
      %31 = sbr.rel (0) target = $region33
    $region32: #{city_encoder.1} parent=1 // pred_region
      _
    $region33: #{city_encoder.1} parent=1 // pred_fallthru
      _
    %v32 = vld [vmem:[%s0] sm:$0xff]
    %v33 = vld [vmem:[%s0 + $0x8] sm:$0xff]
    %v34 = vld [vmem:[%s0 + $0x10] sm:$0xff]
    %v35 = vld [vmem:[%s0 + $0x18] sm:$0xff]
    %v36 = vld [vmem:[%s4] sm:$0x3]
    %38 = vset.pattern.permute.xlu0 0
    %39 = vperm.xlu0 %38, %v32
    %v40 = vpop.permute.xlu0 %39
    %43 = vset.pattern.permute.xlu0 0
    %44 = vperm.xlu0 %43, %v33
    %v45 = vpop.permute.xlu0 %44
    %48 = vset.pattern.permute.xlu0 0
    %49 = vperm.xlu0 %48, %v34
    %v50 = vpop.permute.xlu0 %49
    %53 = vset.pattern.permute.xlu0 0
    %54 = vperm.xlu0 %53, %v35
    %v55 = vpop.permute.xlu0 %54
    %v57 = vlaneseq
    %v58 = vshrl.u32 %v57, 7
    %v59 = vsub.s32 0, %v58
    %v60 = vrot.slane %v36, %v59
    %v61 = vmul.f32 %v40, %v60
    %v62 = vmul.f32 %v45, %v60
    %v63 = vmul.f32 %v50, %v60
    %v64 = vmul.f32 %v55, %v60
    %65 = vset.pattern.permute.xlu0 1
    %66 = vperm.xlu0 %65, %v32
    %v67 = vpop.permute.xlu0 %66
    %69 = vset.pattern.permute.xlu0 1
    %70 = vperm.xlu0 %69, %v33
    %v71 = vpop.permute.xlu0 %70
    %73 = vset.pattern.permute.xlu0 1
    %74 = vperm.xlu0 %73, %v34
    %v75 = vpop.permute.xlu0 %74
    %77 = vset.pattern.permute.xlu0 1
    %78 = vperm.xlu0 %77, %v35
    %v79 = vpop.permute.xlu0 %78
    %v81 = vlaneseq
    %v82 = vshrl.u32 %v81, 7
    %v83 = vsub.s32 1, %v82
    %v84 = vrot.slane %v36, %v83
    %v85 = vmul.f32 %v67, %v84
    %v86 = vmul.f32 %v71, %v84
    %v87 = vmul.f32 %v75, %v84
    %v88 = vmul.f32 %v79, %v84
    %v89 = vadd.f32 %v61, %v85
    %v90 = vadd.f32 %v62, %v86
    %v91 = vadd.f32 %v63, %v87
    %v92 = vadd.f32 %v64, %v88
    %v93 = vld [vmem:[%s5] sm:$0x1]
    %v95 = vlaneseq
    %v96 = vshrl.u32 %v95, 7
    %v97 = vsub.s32 0, %v96
    %v98 = vrot.slane %v93, %v97
    %v100 = vadd.f32 %v89, %v98
    %v101 = vadd.f32 %v90, %v98
    %v102 = vadd.f32 %v91, %v98
    %v103 = vadd.f32 %v92, %v98
    %v104 = vld [vmem:[%s1] sm:$0x3]
    %v105 = vld [vmem:[%s2] sm:$0x3]
    %107 = vset.pattern.permute.xlu0 0
    %108 = vperm.xlu0 %107, %v104
    %v109 = vpop.permute.xlu0 %108
    %v111 = vlaneseq
    %v112 = vshrl.u32 %v111, 7
    %v113 = vsub.s32 0, %v112
    %v114 = vrot.slane %v105, %v113
    %v115 = vmul.f32 %v109, %v114
    %116 = vset.pattern.permute.xlu0 1
    %117 = vperm.xlu0 %116, %v104
    %v118 = vpop.permute.xlu0 %117
    %v120 = vlaneseq
    %v121 = vshrl.u32 %v120, 7
    %v122 = vsub.s32 1, %v121
    %v123 = vrot.slane %v105, %v122
    %v124 = vmul.f32 %v118, %v123
    %v125 = vadd.f32 %v115, %v124
    %v126 = vld [vmem:[%s3] sm:$0x1]
    %v128 = vlaneseq
    %v129 = vshrl.u32 %v128, 7
    %v130 = vsub.s32 0, %v129
    %v131 = vrot.slane %v126, %v130
    %v133 = vadd.f32 %v125, %v131
    %v134 = vld [vmem:[%s6] sm:$0x1]
    %v136 = vlaneseq
    %v137 = vshrl.u32 %v136, 7
    %v138 = vsub.s32 0, %v137
    %v139 = vrot.slane %v134, %v138
    %v141 = vadd.f32 %v133, %v139
    %v142 = vlaneseq
    %v143 = vshrl.u32 %v142, 7
    %v144 = vadd.s32 %v143, 8
    %vm145 = vcmp.eq.s32.totalorder %v143, 0
    %vm146 = vcmp.eq.s32.totalorder %v144, 0
    %v149 = vunpack.c.l.s4 1966171168
    %v150 = vunpack.c.0.s8 %v149
    %v151 = vlaneseq
    %v152 = vshrl.u32 %v151, 7
    %v153 = vsub.s32 %v150, %v152
    %v154 = vrot.slane %v141, %v153
    %v155 = vcombine.high %v154, %v154
    %v157 = vunpack.c.l.s4 1966171168
    %v158 = vunpack.c.0.s8 %v157
    %v159 = vlaneseq
    %v160 = vshrl.u32 %v159, 7
    %v161 = vsub.s32 %v158, %v160
    %v162 = vrot.slane %v154, %v161
    %v164 = vunpack.c.l.s4 1966171168
    %v165 = vunpack.c.0.s8 %v164
    %v166 = vlaneseq
    %v167 = vshrl.u32 %v166, 7
    %v168 = vsub.s32 %v165, %v167
    %v169 = vrot.slane %v155, %v168
    %v170 = vlaneseq
    %v171 = vshrl.u32 %v170, 7
    %v172 = vsub.s32 0, %v171
    %v173 = vrot.slane %v162, %v172
    %v174 = vlaneseq
    %v175 = vshrl.u32 %v174, 7
    %v176 = vsub.s32 0, %v175
    %v177 = vrot.slane %v169, %v176
    %v180 = vsel %vm145, %v173, %v100
    %v181 = vsel %vm146, %v173, %v101
    %v182 = vsel %vm145, %v177, %v102
    %v183 = vsel %vm146, %v177, %v103
    %184 = vst [vmem:[%s8] sm:$0xff] %v180
    %185 = vst [vmem:[%s8 + $0x8] sm:$0xff] %v181
    %186 = vst [vmem:[%s8 + $0x18] sm:$0xff] %v182
    %187 = vst [vmem:[%s8 + $0x20] sm:$0xff] %v183
    %v188 = vld [vmem:[%s7] sm:$0xff]
    %v191 = vunpack.c.l.s4 1966171168
    %v192 = vunpack.c.0.s8 %v191
    %v193 = vlaneseq
    %v194 = vshrl.u32 %v193, 7
    %v195 = vsub.s32 %v192, %v194
    %v196 = vrot.slane %v133, %v195
    %v197 = vcombine.high %v196, %v196
    %v199 = vunpack.c.l.s4 1966171168
    %v200 = vunpack.c.0.s8 %v199
    %v201 = vlaneseq
    %v202 = vshrl.u32 %v201, 7
    %v203 = vsub.s32 %v200, %v202
    %v204 = vrot.slane %v196, %v203
    %v206 = vunpack.c.l.s4 1966171168
    %v207 = vunpack.c.0.s8 %v206
    %v208 = vlaneseq
    %v209 = vshrl.u32 %v208, 7
    %v210 = vsub.s32 %v207, %v209
    %v211 = vrot.slane %v197, %v210
    %v212 = vlaneseq
    %v213 = vshrl.u32 %v212, 7
    %v214 = vsub.s32 0, %v213
    %v215 = vrot.slane %v204, %v214
    %v216 = vlaneseq
    %v217 = vshrl.u32 %v216, 7
    %v218 = vsub.s32 0, %v217
    %v219 = vrot.slane %v211, %v218
    %v222 = vadd.f32 %v215, %v188
    %v223 = vadd.f32 %v219, %v188
    %224 = vst [vmem:[%s8 + $0x10] sm:$0xff] %v222
    %225 = vst [vmem:[%s8 + $0x28] sm:$0xff] %v223
    %v226 = vadd.f32 %v180, %v181
    %v227 = vrot.slane %v226, 4
    %v228 = vadd.f32 %v226, %v227
    %v229 = vrot.slane %v228, 2
    %v230 = vadd.f32 %v228, %v229
    %v231 = vrot.slane %v230, 1
    %v232 = vadd.f32 %v230, %v231
    %v233 = vadd.f32 %v182, %v183
    %v234 = vrot.slane %v233, 4
    %v235 = vadd.f32 %v233, %v234
    %v236 = vrot.slane %v235, 2
    %v237 = vadd.f32 %v235, %v236
    %v238 = vrot.slane %v237, 1
    %v239 = vadd.f32 %v237, %v238
    %v240 = vmul.f32 %v133, 5.0
    %v241 = vrot.slane %v188, 4
    %v242 = vadd.f32 %v188, %v241
    %v243 = vrot.slane %v242, 2
    %v244 = vadd.f32 %v242, %v243
    %v245 = vrot.slane %v244, 1
    %v246 = vadd.f32 %v244, %v245
    %v247 = vadd.f32 %v240, %v246
    %v249 = vrot.slane %v247, 1
    %v252 = vadd.f32 %v232, %v247
    %v253 = vadd.f32 %v239, %v249
    %v254 = vmul.f32 %v252, 0.04761905
    %v255 = vmul.f32 %v253, 0.04761905
    %v258 = vrot.slane %v255, 7
    %vm259 = vcmask 1041409
    %v260 = vsel %vm259, %v258, %v254
    %262 = vst [vmem:[#allocation2] sm:$0x3] %v260
    // Predicated region
    $region34: #{city_encoder.1} parent=1 // pred_check
      _
    $region35: #{city_encoder.1} parent=1 // pred_check_branch
      %264 = sbr.rel (0) target = $region37
    $region36: #{city_encoder.1} parent=1 // pred_region
      _
    $region37: #{city_encoder.1} parent=1 // pred_fallthru
      _
    // Predicated region
    $region38: #{city_encoder.1} parent=1 // pred_check
      _
    $region39: #{city_encoder.1} parent=1 // pred_check_branch
      %266 = sbr.rel (0) target = $region41
    $region40: #{city_encoder.1} parent=1 // pred_region
      %s268 = ssub.s32 32, 32
      %269 = vsyncadd [#allocation3], %s268
      %s271 = sshll.u32 [#allocation2], 4
      %s272 = int_to_ptr.vmem [resolvable:$true] %s271
      %274 = dma.vmem_to_hbm [thread:$0]  %s272, 32, %s9, [#allocation3]
    $region41: #{city_encoder.1} parent=1 // pred_fallthru
      _
    // Predicated region
    $region42: #{city_encoder.1} parent=1 // pred_check
      _
    $region43: #{city_encoder.1} parent=1 // pred_check_branch
      %276 = sbr.rel (0) target = $region45
    $region44: #{city_encoder.1} parent=1 // pred_region
      _
    $region45: #{city_encoder.1} parent=1 // pred_fallthru
      _
    // Predicated region
    $region46: #{city_encoder.1} parent=1 // pred_check
      _
    $region47: #{city_encoder.1} parent=1 // pred_check_branch
      %278 = sbr.rel (0) target = $region49
    $region48: #{city_encoder.1} parent=1 // pred_region
      %279 = dma.done [#allocation3], 32
    $region49: #{city_encoder.1} parent=1 // pred_fallthru
      _
    %280 = vsyncpa [#allocation3], 1

</llo_original>
